<compile_context>
chip_gen: v6e
topology: v6e:2x2x1
jax: 0.10.0
libtpu: 0.0.40
codegen_flags: <defaults>
</compile_context>

<pallas_src>
import functools
import math

import jax
import jax.numpy as jnp
from jax.experimental import pallas as pl
from jax.experimental.pallas import tpu as pltpu

LANE = 128     # lane tile (last dim)
SUBLANE = 8    # sublane tile (second-minor dim)


def _round_up(x, m):
    return (x + m - 1) // m * m


def _nbytes(shape, dtype):
    n = 1
    for s in shape:
        n *= s
    return n * jnp.dtype(dtype).itemsize


# ---------------------------------------------------------------------------
# Kernel
# ---------------------------------------------------------------------------
def _lstm_cell_kernel(xh_ref, c_ref, *rest, has_mask):
    """One LSTM-cell step, K-tiled.

    Grid: (batch_tiles [parallel], K_tiles [arbitrary])

    xh_ref   : (TB, TK)      slice of [x | h] (weight dtype)
    c_ref    : (TB, Hp)      previous cell state, fp32
    mask_ref : (TB, 1|Hp)    optional output mask, fp32 (only if has_mask)
    w_ref    : (TK, 4*Hp)    K-slice of packed [Wx ; Wh], gate order [i,f,g,o],
                             each gate block Hp-wide (lane aligned)
    b_ref    : (1, 4*Hp)     combined (input + hidden) bias, fp32
    h_out    : (TB, Hp)      fp32
    c_out    : (TB, Hp)      fp32
    acc_ref  : (TB, 4*Hp)    fp32 accumulator scratch (persists across K steps)
    """
    if has_mask:
        mask_ref, w_ref, b_ref, h_out_ref, c_out_ref, acc_ref = rest
    else:
        w_ref, b_ref, h_out_ref, c_out_ref, acc_ref = rest
        mask_ref = None

    k = pl.program_id(1)

    @pl.when(k == 0)
    def _():
        acc_ref[...] = jnp.zeros_like(acc_ref)

    # MXU: accumulate this K-chunk's contribution (fp32 accumulation).
    acc_ref[...] += jnp.dot(xh_ref[...], w_ref[...],
                            preferred_element_type=jnp.float32)

    @pl.when(k == pl.num_programs(1) - 1)
    def _():
        Hp = c_ref.shape[1]
        gates = acc_ref[...] + b_ref[...]

        # sigmoid(z) == 0.5 * (tanh(0.5*z) + 1): one EUP transcendental per gate.
        def sig(z):
            return 0.5 * jnp.tanh(0.5 * z) + 0.5

        # Hp is a multiple of 128 -> every slice is lane-tile aligned.
        # Tight live ranges: each gate is consumed into c / h immediately.
        c = sig(gates[:, 1 * Hp:2 * Hp]) * c_ref[...]                 # f * c_prev
        c = c + sig(gates[:, 0 * Hp:1 * Hp]) * jnp.tanh(gates[:, 2 * Hp:3 * Hp])  # + i*g
        h = sig(gates[:, 3 * Hp:4 * Hp]) * jnp.tanh(c)
        if mask_ref is not None:
            h = h * mask_ref[...]          # (TB,1) or (TB,Hp): VPU broadcast

        h_out_ref[...] = h
        c_out_ref[...] = c


# ---------------------------------------------------------------------------
# Wrapper
# ---------------------------------------------------------------------------
def lstm_cell_pallas(x, prev_h, prev_c, w_packed, b_packed, mask=None,
                     *, block_b=256, block_k=512):
    """One LSTM-cell step.

    x:(B,I)  prev_h,prev_c:(B,H)  w_packed:(Kp,4*Hp)  b_packed:(1,4*Hp)
    mask: optional, broadcastable to (B, H); multiplies h only (like the module).
    Returns (h, c), each (B, H) in fp32.
    """
    B, I = x.shape
    H = prev_h.shape[1]
    Kp, four_Hp = w_packed.shape
    Hp = four_Hp // 4
    assert Hp % LANE == 0 and Hp >= H
    assert Kp % LANE == 0 and Kp >= I + H
    assert b_packed.shape == (1, 4 * Hp)

    f32 = jnp.float32
    compute_dtype = w_packed.dtype          # xh is fed to the MXU in this dtype

    # --- batch / K tiling ---------------------------------------------------
    TB = min(block_b, _round_up(B, SUBLANE))
    if TB >= LANE:
        TB = (TB // LANE) * LANE            # lane-multiple M tiles (fills v5e MXU)
    else:
        TB = _round_up(TB, SUBLANE)
    Bp = _round_up(B, TB)

    block_k = max(LANE, (block_k // LANE) * LANE)
    TK = math.gcd(Kp, block_k)              # multiple of 128, divides Kp
    nk = Kp // TK

    # --- pack + zero-pad small recurrent inputs (weights packed at init) -----
    xh = jnp.concatenate([x, prev_h], axis=1).astype(compute_dtype)
    xh = jnp.pad(xh, ((0, Bp - B), (0, Kp - (I + H))))
    c0 = jnp.pad(prev_c.astype(f32), ((0, Bp - B), (0, Hp - H)))

    has_mask = mask is not None
    operands = [xh, c0]
    in_specs = [
        pl.BlockSpec((TB, TK), lambda b, k: (b, k)),
        pl.BlockSpec((TB, Hp), lambda b, k: (b, 0)),
    ]
    mask_bytes = 0
    if has_mask:
        m = jnp.asarray(mask, f32)
        if m.ndim == 1:
            m = m[:, None]
        if m.shape[0] == 1:
            m = jnp.broadcast_to(m, (B, m.shape[1]))
        if m.shape[1] == 1:
            # Row mask: keep it (Bp, 1); broadcast happens in-kernel on the VPU.
            m = jnp.pad(m, ((0, Bp - B), (0, 0)))
            m_cols = 1
        else:
            m = jnp.broadcast_to(m, (B, H))
            m = jnp.pad(m, ((0, Bp - B), (0, Hp - H)))
            m_cols = Hp
        operands.append(m)
        in_specs.append(pl.BlockSpec((TB, m_cols), lambda b, k: (b, 0)))
        mask_bytes = _nbytes((Bp, m_cols), f32)

    # Weight: K-sliced (pipelines with MXU); bias: constant block (resident).
    in_specs += [
        pl.BlockSpec((TK, 4 * Hp), lambda b, k: (k, 0)),
        pl.BlockSpec((1, 4 * Hp), lambda b, k: (0, 0)),
    ]
    operands += [w_packed, b_packed]

    out_specs = (
        pl.BlockSpec((TB, Hp), lambda b, k: (b, 0)),
        pl.BlockSpec((TB, Hp), lambda b, k: (b, 0)),
    )

    # --- VMEM budget (double-buffered tiles + resident scratch) --------------
    vmem_need = (
        2 * _nbytes((TK, 4 * Hp), w_packed.dtype)     # weight K-chunks
        + 2 * _nbytes((TB, TK), compute_dtype)        # xh tiles
        + 2 * _nbytes((TB, Hp), f32)                  # prev_c tiles
        + 2 * _nbytes((1, 4 * Hp), f32)               # bias
        + 2 * 2 * _nbytes((TB, Hp), f32)              # h / c outputs
        + _nbytes((TB, 4 * Hp), f32)                  # accumulator scratch
        + (2 * _nbytes((TB, 1 if mask_bytes == 0 else (mask_bytes // (Bp * 4))), f32)
           if has_mask else 0)
    )
    vmem_limit = min(int(vmem_need * 1.25) + (4 << 20), 110 << 20)

    cost = pl.CostEstimate(
        flops=2 * Bp * Kp * 4 * Hp,
        transcendentals=5 * Bp * Hp,                  # 4 gates + tanh(c)
        bytes_accessed=(_nbytes((Kp, 4 * Hp), w_packed.dtype)
                        + _nbytes((1, 4 * Hp), f32)
                        + _nbytes((Bp, Kp), compute_dtype)
                        + _nbytes((Bp, Hp), f32)      # c in
                        + mask_bytes
                        + 2 * _nbytes((Bp, Hp), f32)),  # h, c out
    )

    h_pad, c_pad = pl.pallas_call(
        functools.partial(_lstm_cell_kernel, has_mask=has_mask),
        out_shape=(
            jax.ShapeDtypeStruct((Bp, Hp), f32),      # keep h in fp32
            jax.ShapeDtypeStruct((Bp, Hp), f32),      # keep c in fp32 (recurrence-safe)
        ),
        grid=(Bp // TB, nk),
        in_specs=in_specs,
        out_specs=out_specs,
        scratch_shapes=[pltpu.VMEM((TB, 4 * Hp), f32)],
        compiler_params=pltpu.CompilerParams(
            dimension_semantics=("parallel", "arbitrary"),
            vmem_limit_bytes=vmem_limit,
        ),
        cost_estimate=cost,
    )(*operands)

    return h_pad[:B, :H], c_pad[:B, :H]


# ---------------------------------------------------------------------------
# Parameter init / packing (matches PyTorch default init of MyLSTMCell)
# ---------------------------------------------------------------------------
def init_lstm_params(key, input_size, hidden_size, weight_dtype=jnp.bfloat16):
    """uniform(-stdv, stdv), stdv = 1/sqrt(H), packed TPU-friendly.

    Returns:
      w_packed : (Kp, 4*Hp)  rows = [Wx ; Wh], gate blocks [i, f, g, o], each
                 Hp = round_up(H,128) wide; Kp = round_up(I+H,128); zero padded.
                 bf16 by default (MXU-native, half the weight HBM traffic).
      b_packed : (1, 4*Hp)   combined (input + hidden) bias per gate, fp32.
    """
    I, H = input_size, hidden_size
    Hp = _round_up(H, LANE)
    Kp = _round_up(I + H, LANE)
    stdv = 1.0 / math.sqrt(H)
    keys = jax.random.split(key, 16)
    u = lambda k, shape: jax.random.uniform(k, shape, jnp.float32,
                                            minval=-stdv, maxval=stdv)

    w_blocks, b_blocks = [], []
    ki = 0
    for _gate in ("i", "f", "g", "o"):
        w_in = u(keys[ki], (H, I)); ki += 1      # ii / if_ / ig / io  (out, in) like nn.Linear
        b_in = u(keys[ki], (H,)); ki += 1
        w_h = u(keys[ki], (H, H)); ki += 1       # hi / hf / hg / ho
        b_h = u(keys[ki], (H,)); ki += 1
        # y_gate = x @ w_in.T + h @ w_h.T + (b_in + b_h)
        w_gate = jnp.concatenate([w_in.T, w_h.T], axis=0)             # (I+H, H)
        w_gate = jnp.pad(w_gate, ((0, Kp - (I + H)), (0, Hp - H)))    # zero pad
        b_gate = jnp.pad(b_in + b_h, (0, Hp - H))
        w_blocks.append(w_gate)
        b_blocks.append(b_gate)

    w_packed = jnp.concatenate(w_blocks, axis=1).astype(weight_dtype)   # (Kp, 4*Hp)
    b_packed = jnp.concatenate(b_blocks)[None, :].astype(jnp.float32)   # (1, 4*Hp)
    return w_packed, b_packed


# ---------------------------------------------------------------------------
# Pure-JAX reference (same packed params, same MXU-input dtype) for checking
# ---------------------------------------------------------------------------
def lstm_cell_ref(x, prev_h, prev_c, w_packed, b_packed, mask=None):
    B, I = x.shape
    H = prev_h.shape[1]
    Hp = w_packed.shape[1] // 4
    xh = jnp.concatenate([x, prev_h], axis=1).astype(w_packed.dtype)
    gates = jnp.dot(xh, w_packed[: I + H],
                    preferred_element_type=jnp.float32) + b_packed
    gi = lambda k: gates[:, k * Hp: k * Hp + H]
    i = jax.nn.sigmoid(gi(0))
    f = jax.nn.sigmoid(gi(1))
    g = jnp.tanh(gi(2))
    o = jax.nn.sigmoid(gi(3))
    c = f * prev_c.astype(jnp.float32) + g * i
    h = o * jnp.tanh(c)
    if mask is not None:
        h = h * jnp.asarray(mask, jnp.float32)
    return h, c


if __name__ == "__main__":
    key = jax.random.PRNGKey(0)

    # ---------------- small demo shapes -------------------------------------
    B, I, H = 8, 16, 32
    k_param, k_x, k_h, k_c, k_m = jax.random.split(key, 5)
    x = jax.random.normal(k_x, (B, I), jnp.float32)
    prev_h = jax.random.normal(k_h, (B, H), jnp.float32)
    prev_c = jax.random.normal(k_c, (B, H), jnp.float32)
    mask = (jax.random.uniform(k_m, (B, 1)) > 0.3).astype(jnp.float32)

    # fp32 weights: tight check (no mask, and with row mask fused in-kernel)
    w32, b32 = init_lstm_params(k_param, I, H, weight_dtype=jnp.float32)
    h_new, c_new = lstm_cell_pallas(x, prev_h, prev_c, w32, b32)
    jax.block_until_ready((h_new, c_new))
    h_ref, c_ref = lstm_cell_ref(x, prev_h, prev_c, w32, b32)
    assert jnp.allclose(h_new, h_ref, atol=1e-4, rtol=1e-4)
    assert jnp.allclose(c_new, c_ref, atol=1e-4, rtol=1e-4)

    h_m, c_m = lstm_cell_pallas(x, prev_h, prev_c, w32, b32, mask=mask)
    jax.block_until_ready((h_m, c_m))
    h_mr, c_mr = lstm_cell_ref(x, prev_h, prev_c, w32, b32, mask=mask)
    assert jnp.allclose(h_m, h_mr, atol=1e-4, rtol=1e-4)
    assert jnp.allclose(c_m, c_mr, atol=1e-4, rtol=1e-4)

    # bf16 weights (default, MXU-native) + bf16 xh, fp32 accumulation/gate math
    w16, b16 = init_lstm_params(k_param, I, H)          # bf16 by default
    h_bf, c_bf = lstm_cell_pallas(x, prev_h, prev_c, w16, b16, mask=mask)
    jax.block_until_ready((h_bf, c_bf))
    h_bfr, c_bfr = lstm_cell_ref(x, prev_h, prev_c, w16, b16, mask=mask)
    assert jnp.allclose(h_bf, h_bfr, atol=2e-2, rtol=2e-2)
    assert jnp.allclose(c_bf, c_bfr, atol=2e-2, rtol=2e-2)

    # ------------- medium shapes: exercise batch tiling + K-tiling -----------
    B2, I2, H2 = 20, 300, 256          # Kp=640 -> 5 K-steps at block_k=128
    k2 = jax.random.split(key, 6)
    x2 = jax.random.normal(k2[0], (B2, I2), jnp.float32)
    h2 = jax.random.normal(k2[1], (B2, H2), jnp.float32)
    c2 = jax.random.normal(k2[2], (B2, H2), jnp.float32)
    m2 = (jax.random.uniform(k2[3], (B2, H2)) > 0.5).astype(jnp.float32)
    w2, bb2 = init_lstm_params(k2[4], I2, H2, weight_dtype=jnp.float32)

    h_o, c_o = lstm_cell_pallas(x2, h2, c2, w2, bb2, mask=m2,
                                block_b=16, block_k=128)   # grid = (2, 5)
    jax.block_until_ready((h_o, c_o))
    h_r, c_r = lstm_cell_ref(x2, h2, c2, w2, bb2, mask=m2)
    assert jnp.allclose(h_o, h_r, atol=1e-3, rtol=1e-3)
    assert jnp.allclose(c_o, c_r, atol=1e-3, rtol=1e-3)

    print("KERNEL_OK")
</pallas_src>

<mosaic_0001>
module attributes {stable_mosaic.version = 11 : i64} {
  func.func @_lstm_cell_kernel(%arg0: i32, %arg1: i32, %arg2: memref<8x128xf32, #tpu.memory_space<vmem>>, %arg3: memref<8x128xf32, #tpu.memory_space<vmem>>, %arg4: memref<128x512xf32, #tpu.memory_space<vmem>>, %arg5: memref<1x512xf32, #tpu.memory_space<vmem>>, %arg6: memref<8x128xf32, #tpu.memory_space<vmem>>, %arg7: memref<8x128xf32, #tpu.memory_space<vmem>>, %arg8: memref<8x512xf32, #tpu.memory_space<vmem>>) attributes {dimension_semantics = [#tpu.dimension_semantics<parallel>, #tpu.dimension_semantics<arbitrary>], iteration_bounds = array<i64: 1, 1>, scalar_prefetch = 0 : i64, scratch_operands = 1 : i64, tpu.core_type = #tpu.core_type<tc>, window_params = [{transform_indices = @transform_0, window_bounds = array<i64: 8, 128>}, {transform_indices = @transform_1, window_bounds = array<i64: 8, 128>}, {transform_indices = @transform_2, window_bounds = array<i64: 128, 512>}, {pipeline_mode = #tpu.pipeline_mode<synchronous>, transform_indices = @transform_3, window_bounds = array<i64: 1, 512>}, {transform_indices = @transform_4, window_bounds = array<i64: 8, 128>}, {transform_indices = @transform_5, window_bounds = array<i64: 8, 128>}]} {
    %c0_i32 = arith.constant 0 : i32
    %0 = arith.cmpi eq, %arg1, %c0_i32 : i32
    %1 = arith.extui %0 : i1 to i32
    %c0_i32_0 = arith.constant 0 : i32
    %2 = arith.cmpi ne, %1, %c0_i32_0 : i32
    scf.if %2 {
      %cst_10 = arith.constant 0.000000e+00 : f32
      %12 = vector.broadcast %cst_10 : f32 to vector<8x512xf32>
      %c0_11 = arith.constant 0 : index
      %c0_12 = arith.constant 0 : index
      %13 = vector.load %arg8[%c0_11, %c0_12] : memref<8x512xf32, #tpu.memory_space<vmem>>, vector<8x512xf32>
      tpu.vector_store %arg8[%c0_11, %c0_12], %12 {strides = array<i32>} : memref<8x512xf32, #tpu.memory_space<vmem>>, vector<8x512xf32>,
    } else {
    }
    %c0 = arith.constant 0 : index
    %c0_1 = arith.constant 0 : index
    %3 = vector.load %arg8[%c0, %c0_1] : memref<8x512xf32, #tpu.memory_space<vmem>>, vector<8x512xf32>
    %c0_2 = arith.constant 0 : index
    %c0_3 = arith.constant 0 : index
    %4 = vector.load %arg2[%c0_2, %c0_3] : memref<8x128xf32, #tpu.memory_space<vmem>>, vector<8x128xf32>
    %c0_4 = arith.constant 0 : index
    %c0_5 = arith.constant 0 : index
    %5 = vector.load %arg4[%c0_4, %c0_5] : memref<128x512xf32, #tpu.memory_space<vmem>>, vector<128x512xf32>
    %cst = arith.constant dense<0.000000e+00> : vector<8x512xf32>
    %6 = tpu.matmul %4, %5, %cst {dimension_numbers = #tpu.dot_dimension_numbers<[1], [0], [0], [1], [0, 0, 1, 1], [], []>} : vector<8x128xf32>, vector<128x512xf32>, vector<8x512xf32> -> vector<8x512xf32>
    %7 = arith.addf %3, %6 : vector<8x512xf32>
    %c0_6 = arith.constant 0 : index
    %c0_7 = arith.constant 0 : index
    %8 = vector.load %arg8[%c0_6, %c0_7] : memref<8x512xf32, #tpu.memory_space<vmem>>, vector<8x512xf32>
    tpu.vector_store %arg8[%c0_6, %c0_7], %7 {strides = array<i32>} : memref<8x512xf32, #tpu.memory_space<vmem>>, vector<8x512xf32>,
    %c0_i32_8 = arith.constant 0 : i32
    %9 = arith.cmpi eq, %arg1, %c0_i32_8 : i32
    %10 = arith.extui %9 : i1 to i32
    %c0_i32_9 = arith.constant 0 : i32
    %11 = arith.cmpi ne, %10, %c0_i32_9 : i32
    scf.if %11 {
      %c0_10 = arith.constant 0 : index
      %c0_11 = arith.constant 0 : index
      %12 = vector.load %arg8[%c0_10, %c0_11] : memref<8x512xf32, #tpu.memory_space<vmem>>, vector<8x512xf32>
      %c0_12 = arith.constant 0 : index
      %c0_13 = arith.constant 0 : index
      %13 = vector.load %arg5[%c0_12, %c0_13] : memref<1x512xf32, #tpu.memory_space<vmem>>, vector<1x512xf32>
      %14 = vector.broadcast %13 : vector<1x512xf32> to vector<8x512xf32>
      %15 = arith.addf %12, %14 : vector<8x512xf32>
      %16 = vector.extract_strided_slice %15 {offsets = [0, 128], sizes = [8, 128], strides = [1, 1]} : vector<8x512xf32> to vector<8x128xf32>
      %cst_14 = arith.constant 5.000000e-01 : f32
      %17 = vector.broadcast %cst_14 : f32 to vector<8x128xf32>
      %18 = arith.mulf %17, %16 : vector<8x128xf32>
      %19 = math.tanh %18 : vector<8x128xf32>
      %cst_15 = arith.constant 5.000000e-01 : f32
      %20 = vector.broadcast %cst_15 : f32 to vector<8x128xf32>
      %21 = arith.mulf %20, %19 : vector<8x128xf32>
      %cst_16 = arith.constant 5.000000e-01 : f32
      %22 = vector.broadcast %cst_16 : f32 to vector<8x128xf32>
      %23 = arith.addf %21, %22 : vector<8x128xf32>
      %c0_17 = arith.constant 0 : index
      %c0_18 = arith.constant 0 : index
      %24 = vector.load %arg3[%c0_17, %c0_18] : memref<8x128xf32, #tpu.memory_space<vmem>>, vector<8x128xf32>
      %25 = arith.mulf %23, %24 : vector<8x128xf32>
      %26 = vector.extract_strided_slice %15 {offsets = [0, 0], sizes = [8, 128], strides = [1, 1]} : vector<8x512xf32> to vector<8x128xf32>
      %cst_19 = arith.constant 5.000000e-01 : f32
      %27 = vector.broadcast %cst_19 : f32 to vector<8x128xf32>
      %28 = arith.mulf %27, %26 : vector<8x128xf32>
      %29 = math.tanh %28 : vector<8x128xf32>
      %cst_20 = arith.constant 5.000000e-01 : f32
      %30 = vector.broadcast %cst_20 : f32 to vector<8x128xf32>
      %31 = arith.mulf %30, %29 : vector<8x128xf32>
      %cst_21 = arith.constant 5.000000e-01 : f32
      %32 = vector.broadcast %cst_21 : f32 to vector<8x128xf32>
      %33 = arith.addf %31, %32 : vector<8x128xf32>
      %34 = vector.extract_strided_slice %15 {offsets = [0, 256], sizes = [8, 128], strides = [1, 1]} : vector<8x512xf32> to vector<8x128xf32>
      %35 = math.tanh %34 : vector<8x128xf32>
      %36 = arith.mulf %33, %35 : vector<8x128xf32>
      %37 = arith.addf %25, %36 : vector<8x128xf32>
      %38 = vector.extract_strided_slice %15 {offsets = [0, 384], sizes = [8, 128], strides = [1, 1]} : vector<8x512xf32> to vector<8x128xf32>
      %cst_22 = arith.constant 5.000000e-01 : f32
      %39 = vector.broadcast %cst_22 : f32 to vector<8x128xf32>
      %40 = arith.mulf %39, %38 : vector<8x128xf32>
      %41 = math.tanh %40 : vector<8x128xf32>
      %cst_23 = arith.constant 5.000000e-01 : f32
      %42 = vector.broadcast %cst_23 : f32 to vector<8x128xf32>
      %43 = arith.mulf %42, %41 : vector<8x128xf32>
      %cst_24 = arith.constant 5.000000e-01 : f32
      %44 = vector.broadcast %cst_24 : f32 to vector<8x128xf32>
      %45 = arith.addf %43, %44 : vector<8x128xf32>
      %46 = math.tanh %37 : vector<8x128xf32>
      %47 = arith.mulf %45, %46 : vector<8x128xf32>
      %c0_25 = arith.constant 0 : index
      %c0_26 = arith.constant 0 : index
      %48 = vector.load %arg6[%c0_25, %c0_26] : memref<8x128xf32, #tpu.memory_space<vmem>>, vector<8x128xf32>
      tpu.vector_store %arg6[%c0_25, %c0_26], %47 {strides = array<i32>} : memref<8x128xf32, #tpu.memory_space<vmem>>, vector<8x128xf32>,
      %c0_27 = arith.constant 0 : index
      %c0_28 = arith.constant 0 : index
      %49 = vector.load %arg7[%c0_27, %c0_28] : memref<8x128xf32, #tpu.memory_space<vmem>>, vector<8x128xf32>
      tpu.vector_store %arg7[%c0_27, %c0_28], %37 {strides = array<i32>} : memref<8x128xf32, #tpu.memory_space<vmem>>, vector<8x128xf32>,
    } else {
    }
    return
  }
  func.func @transform_0(%arg0: i32, %arg1: i32) -> (i32, i32) {
    %c0_i32 = arith.constant 0 : i32
    return %arg0, %arg1 : i32, i32
  }
  func.func @transform_1(%arg0: i32, %arg1: i32) -> (i32, i32) {
    %c0_i32 = arith.constant 0 : i32
    %c0_i32_0 = arith.constant 0 : i32
    return %arg0, %c0_i32 : i32, i32
  }
  func.func @transform_2(%arg0: i32, %arg1: i32) -> (i32, i32) {
    %c0_i32 = arith.constant 0 : i32
    %c0_i32_0 = arith.constant 0 : i32
    return %arg1, %c0_i32 : i32, i32
  }
  func.func @transform_3(%arg0: i32, %arg1: i32) -> (i32, i32) {
    %c0_i32 = arith.constant 0 : i32
    %c0_i32_0 = arith.constant 0 : i32
    %c0_i32_1 = arith.constant 0 : i32
    return %c0_i32, %c0_i32_0 : i32, i32
  }
  func.func @transform_4(%arg0: i32, %arg1: i32) -> (i32, i32) {
    %c0_i32 = arith.constant 0 : i32
    %c0_i32_0 = arith.constant 0 : i32
    return %arg0, %c0_i32 : i32, i32
  }
  func.func @transform_5(%arg0: i32, %arg1: i32) -> (i32, i32) {
    %c0_i32 = arith.constant 0 : i32
    %c0_i32_0 = arith.constant 0 : i32
    return %arg0, %c0_i32 : i32, i32
  }
}

</mosaic_0001>

<llo_original>
// kernel: tpu_custom_call.1
$region0: #{tpu_custom_call.1}
  #allocation0 [shape = 'u32[]', space=smem, size = 0x4, offset = 0x4, fixed_abs, tag = 'smem constant byte address 0x4 - core index']
  #allocation1 [shape = 'u32[144,128]{1,0:T(1,128)}', space=vmem, size = 0x12000, scoped, tag = 'internal scratch']
  #allocation2 [shape = 'f32[8,512]{1,0:T(8,128)}', space=vmem, size = 0x4000, scoped, tag = 'scratch operand']
  %s0 = inlined_call_operand.hbm [shape: f32[8,128], index: 0, kind: input, shape index: {}]
  %s1 = inlined_call_operand.hbm [shape: f32[8,128], index: 1, kind: input, shape index: {}]
  %s2 = inlined_call_operand.hbm [shape: f32[128,512], index: 2, kind: input, shape index: {}]
  %s3 = inlined_call_operand.vmem [shape: f32[1,512], index: 3, kind: input, shape index: {}]
  %s4 = inlined_call_operand.hbm [shape: f32[8,128], index: 4, kind: output, shape index: {0}]
  %s5 = inlined_call_operand.hbm [shape: f32[8,128], index: 5, kind: output, shape index: {1}]
  %6 = xla_tuple %s4, %s5
  %s7 = sld [smem:[#allocation0]]
  $region54: #{tpu_custom_call.1} parent=0
    _
  %s9 = ssub.s32 1, %s7
  %s10 = scalar_select 0, %s9, %s7
  $region1: #{tpu_custom_call.1} parent=0
    #allocation3 [shape = 'u8[4096]{0}', space=vmem, size = 0x1000, scoped, tag = 'input window, operand 0, single buffered']
    #allocation4 [shape = 's32[1]{0}', space=sflag, size = 0x4, scoped, tag = 'scoped memory for tpu_custom_call.1']
    #allocation5 [shape = 's32[1]{0}', space=sflag, size = 0x4, scoped, tag = 'scoped memory for tpu_custom_call.1']
    #allocation6 [shape = 'u8[4096]{0}', space=vmem, size = 0x1000, scoped, tag = 'input window, operand 1, single buffered']
    #allocation7 [shape = 's32[1]{0}', space=sflag, size = 0x4, scoped, tag = 'scoped memory for tpu_custom_call.1']
    #allocation8 [shape = 'u8[262144]{0}', space=vmem, size = 0x40000, scoped, tag = 'input window, operand 2, single buffered']
    #allocation9 [shape = 'u8[4096]{0}', space=vmem, size = 0x1000, scoped, tag = 'output window, operand 0, single buffered']
    #allocation10 [shape = 'u8[4096]{0}', space=vmem, size = 0x1000, scoped, tag = 'output window, operand 1, single buffered']
    #allocation11 [shape = 's32[1]{0}', space=sflag, size = 0x4, scoped, tag = 'scoped memory for tpu_custom_call.1']
    %11 = vsyncpa [#allocation4], 0
    %12 = vsyncpa [#allocation7], 0
    %13 = vsyncpa [#allocation5], 0
    %14 = vsyncpa [#allocation11], 0
    // Predicated region
    $region2: #{tpu_custom_call.1} parent=1 // pred_check
      _
    $region3: #{tpu_custom_call.1} parent=1 // pred_check_branch
      %16 = sbr.rel (0) target = $region5
    $region4: #{tpu_custom_call.1} parent=1 // pred_region
      %s18 = ssub.s32 128, 128
      %19 = vsyncadd [#allocation4], %s18
      %s21 = sshll.u32 [#allocation3], 4
      %s22 = int_to_ptr.vmem [resolvable:$true] %s21
      %24 = dma.hbm_to_vmem [thread:$0]  %s0, 128, %s22, [#allocation4]
    $region5: #{tpu_custom_call.1} parent=1 // pred_fallthru
      _
    // Predicated region
    $region6: #{tpu_custom_call.1} parent=1 // pred_check
      _
    $region7: #{tpu_custom_call.1} parent=1 // pred_check_branch
      %26 = sbr.rel (0) target = $region9
    $region8: #{tpu_custom_call.1} parent=1 // pred_region
      %s28 = ssub.s32 128, 128
      %29 = vsyncadd [#allocation7], %s28
      %s31 = sshll.u32 [#allocation6], 4
      %s32 = int_to_ptr.vmem [resolvable:$true] %s31
      %34 = dma.hbm_to_vmem [thread:$0]  %s1, 128, %s32, [#allocation7]
    $region9: #{tpu_custom_call.1} parent=1 // pred_fallthru
      _
    // Predicated region
    $region10: #{tpu_custom_call.1} parent=1 // pred_check
      _
    $region11: #{tpu_custom_call.1} parent=1 // pred_check_branch
      %36 = sbr.rel (0) target = $region13
    $region12: #{tpu_custom_call.1} parent=1 // pred_region
      %s38 = ssub.s32 8192, 8192
      %39 = vsyncadd [#allocation7], %s38
      %s40 = sshll.u32 [#allocation8], 4
      %s41 = int_to_ptr.vmem [resolvable:$true] %s40
      %46 = dma.hbm_to_vmem [thread:$0]  %s2, 8192, %s41, [#allocation7], 512, 512, 32
    $region13: #{tpu_custom_call.1} parent=1 // pred_fallthru
      _
    // Predicated region
    $region14: #{tpu_custom_call.1} parent=1 // pred_check
      _
    $region15: #{tpu_custom_call.1} parent=1 // pred_check_branch
      %48 = sbr.rel (0) target = $region17
    $region16: #{tpu_custom_call.1} parent=1 // pred_region
      _
    $region17: #{tpu_custom_call.1} parent=1 // pred_fallthru
      _
    // Predicated region
    $region18: #{tpu_custom_call.1} parent=1 // pred_check
      _
    $region19: #{tpu_custom_call.1} parent=1 // pred_check_branch
      %50 = sbr.rel (0) target = $region21
    $region20: #{tpu_custom_call.1} parent=1 // pred_region
      %51 = dma.done [#allocation4], 128
    $region21: #{tpu_custom_call.1} parent=1 // pred_fallthru
      _
    // Predicated region
    $region22: #{tpu_custom_call.1} parent=1 // pred_check
      _
    $region23: #{tpu_custom_call.1} parent=1 // pred_check_branch
      %53 = sbr.rel (0) target = $region25
    $region24: #{tpu_custom_call.1} parent=1 // pred_region
      %54 = dma.done [#allocation7], 128
    $region25: #{tpu_custom_call.1} parent=1 // pred_fallthru
      _
    // Predicated region
    $region26: #{tpu_custom_call.1} parent=1 // pred_check
      _
    $region27: #{tpu_custom_call.1} parent=1 // pred_check_branch
      %56 = sbr.rel (0) target = $region29
    $region28: #{tpu_custom_call.1} parent=1 // pred_region
      %57 = dma.done [#allocation7], 8192
    $region29: #{tpu_custom_call.1} parent=1 // pred_fallthru
      _
    %p58 = scmp.eq.s32.totalorder 0, 0
    // Predicated region
    $region30: #{tpu_custom_call.1} parent=1 // pred_check
      %p59 = pneg %p58
    $region31: #{tpu_custom_call.1} parent=1 // pred_check_branch
      %61 = sbr.rel (%p59) target = $region33
    $region32: #{tpu_custom_call.1} parent=1 // pred_region
      %62 = vst [vmem:[#allocation2] sm:$0xff] 0.0
      %63 = vst [vmem:[#allocation2 + $0x8] sm:$0xff] 0.0
      %64 = vst [vmem:[#allocation2 + $0x10] sm:$0xff] 0.0
      %65 = vst [vmem:[#allocation2 + $0x18] sm:$0xff] 0.0
    $region33: #{tpu_custom_call.1} parent=1 // pred_fallthru
      _
    %v66 = vld [vmem:[#allocation2] sm:$0xff]
    %v67 = vld [vmem:[#allocation2 + $0x8] sm:$0xff]
    %v68 = vld [vmem:[#allocation2 + $0x10] sm:$0xff]
    %v69 = vld [vmem:[#allocation2 + $0x18] sm:$0xff]
    %v70 = vld [vmem:[#allocation3] sm:$0xff]
    %v71 = vld [vmem:[#allocation8] sm:$0xff]
    %v72 = vld [vmem:[#allocation8 + $0x8] sm:$0xff]
    %v73 = vld [vmem:[#allocation8 + $0x10] sm:$0xff]
    %v74 = vld [vmem:[#allocation8 + $0x18] sm:$0xff]
    %v75 = vld [vmem:[#allocation8 + $0x20] sm:$0xff]
    %v76 = vld [vmem:[#allocation8 + $0x28] sm:$0xff]
    %v77 = vld [vmem:[#allocation8 + $0x30] sm:$0xff]
    %v78 = vld [vmem:[#allocation8 + $0x38] sm:$0xff]
    %v79 = vld [vmem:[#allocation8 + $0x40] sm:$0xff]
    %v80 = vld [vmem:[#allocation8 + $0x48] sm:$0xff]
    %v81 = vld [vmem:[#allocation8 + $0x50] sm:$0xff]
    %v82 = vld [vmem:[#allocation8 + $0x58] sm:$0xff]
    %v83 = vld [vmem:[#allocation8 + $0x60] sm:$0xff]
    %v84 = vld [vmem:[#allocation8 + $0x68] sm:$0xff]
    %v85 = vld [vmem:[#allocation8 + $0x70] sm:$0xff]
    %v86 = vld [vmem:[#allocation8 + $0x78] sm:$0xff]
    %v87 = vld [vmem:[#allocation8 + $0x80] sm:$0xff]
    %v88 = vld [vmem:[#allocation8 + $0x88] sm:$0xff]
    %v89 = vld [vmem:[#allocation8 + $0x90] sm:$0xff]
    %v90 = vld [vmem:[#allocation8 + $0x98] sm:$0xff]
    %v91 = vld [vmem:[#allocation8 + $0xa0] sm:$0xff]
    %v92 = vld [vmem:[#allocation8 + $0xa8] sm:$0xff]
    %v93 = vld [vmem:[#allocation8 + $0xb0] sm:$0xff]
    %v94 = vld [vmem:[#allocation8 + $0xb8] sm:$0xff]
    %v95 = vld [vmem:[#allocation8 + $0xc0] sm:$0xff]
    %v96 = vld [vmem:[#allocation8 + $0xc8] sm:$0xff]
    %v97 = vld [vmem:[#allocation8 + $0xd0] sm:$0xff]
    %v98 = vld [vmem:[#allocation8 + $0xd8] sm:$0xff]
    %v99 = vld [vmem:[#allocation8 + $0xe0] sm:$0xff]
    %v100 = vld [vmem:[#allocation8 + $0xe8] sm:$0xff]
    %v101 = vld [vmem:[#allocation8 + $0xf0] sm:$0xff]
    %v102 = vld [vmem:[#allocation8 + $0xf8] sm:$0xff]
    %v103 = vld [vmem:[#allocation8 + $0x100] sm:$0xff]
    %v104 = vld [vmem:[#allocation8 + $0x108] sm:$0xff]
    %v105 = vld [vmem:[#allocation8 + $0x110] sm:$0xff]
    %v106 = vld [vmem:[#allocation8 + $0x118] sm:$0xff]
    %v107 = vld [vmem:[#allocation8 + $0x120] sm:$0xff]
    %v108 = vld [vmem:[#allocation8 + $0x128] sm:$0xff]
    %v109 = vld [vmem:[#allocation8 + $0x130] sm:$0xff]
    %v110 = vld [vmem:[#allocation8 + $0x138] sm:$0xff]
    %v111 = vld [vmem:[#allocation8 + $0x140] sm:$0xff]
    %v112 = vld [vmem:[#allocation8 + $0x148] sm:$0xff]
    %v113 = vld [vmem:[#allocation8 + $0x150] sm:$0xff]
    %v114 = vld [vmem:[#allocation8 + $0x158] sm:$0xff]
    %v115 = vld [vmem:[#allocation8 + $0x160] sm:$0xff]
    %v116 = vld [vmem:[#allocation8 + $0x168] sm:$0xff]
    %v117 = vld [vmem:[#allocation8 + $0x170] sm:$0xff]
    %v118 = vld [vmem:[#allocation8 + $0x178] sm:$0xff]
    %v119 = vld [vmem:[#allocation8 + $0x180] sm:$0xff]
    %v120 = vld [vmem:[#allocation8 + $0x188] sm:$0xff]
    %v121 = vld [vmem:[#allocation8 + $0x190] sm:$0xff]
    %v122 = vld [vmem:[#allocation8 + $0x198] sm:$0xff]
    %v123 = vld [vmem:[#allocation8 + $0x1a0] sm:$0xff]
    %v124 = vld [vmem:[#allocation8 + $0x1a8] sm:$0xff]
    %v125 = vld [vmem:[#allocation8 + $0x1b0] sm:$0xff]
    %v126 = vld [vmem:[#allocation8 + $0x1b8] sm:$0xff]
    %v127 = vld [vmem:[#allocation8 + $0x1c0] sm:$0xff]
    %v128 = vld [vmem:[#allocation8 + $0x1c8] sm:$0xff]
    %v129 = vld [vmem:[#allocation8 + $0x1d0] sm:$0xff]
    %v130 = vld [vmem:[#allocation8 + $0x1d8] sm:$0xff]
    %v131 = vld [vmem:[#allocation8 + $0x1e0] sm:$0xff]
    %v132 = vld [vmem:[#allocation8 + $0x1e8] sm:$0xff]
    %v133 = vld [vmem:[#allocation8 + $0x1f0] sm:$0xff]
    %v134 = vld [vmem:[#allocation8 + $0x1f8] sm:$0xff]
    %135 = vmatprep.subr.mxu0 %v132
    %136 = vmatpush1.msra.mxu0 %v131
    %137 = vmatprep.subr.mxu0 %v128
    %138 = vmatpush1.msra.mxu0 %v127
    %139 = vmatprep.subr.mxu0 %v124
    %140 = vmatpush1.msra.mxu0 %v123
    %141 = vmatprep.subr.mxu0 %v120
    %142 = vmatpush1.msra.mxu0 %v119
    %143 = vmatprep.subr.mxu0 %v116
    %144 = vmatpush1.msra.mxu0 %v115
    %145 = vmatprep.subr.mxu0 %v112
    %146 = vmatpush1.msra.mxu0 %v111
    %147 = vmatprep.subr.mxu0 %v108
    %148 = vmatpush1.msra.mxu0 %v107
    %149 = vmatprep.subr.mxu0 %v104
    %150 = vmatpush1.msra.mxu0 %v103
    %151 = vmatprep.subr.mxu0 %v100
    %152 = vmatpush1.msra.mxu0 %v99
    %153 = vmatprep.subr.mxu0 %v96
    %154 = vmatpush1.msra.mxu0 %v95
    %155 = vmatprep.subr.mxu0 %v92
    %156 = vmatpush1.msra.mxu0 %v91
    %157 = vmatprep.subr.mxu0 %v88
    %158 = vmatpush1.msra.mxu0 %v87
    %159 = vmatprep.subr.mxu0 %v84
    %160 = vmatpush1.msra.mxu0 %v83
    %161 = vmatprep.subr.mxu0 %v80
    %162 = vmatpush1.msra.mxu0 %v79
    %163 = vmatprep.subr.mxu0 %v76
    %164 = vmatpush1.msra.mxu0 %v75
    %165 = vmatprep.subr.mxu0 %v72
    %166 = vmatpush1.msra.mxu0 %v71
    %167 = vmatprep.subr.mxu0 0.0
    %168 = vmatpush2.msra.mxu0 0.0
    %169 = vmatprep.subr.mxu0 0.0
    %170 = vmatpush2.msra.mxu0 0.0
    %171 = vmatprep.subr.mxu0 0.0
    %172 = vmatpush2.msra.mxu0 0.0
    %173 = vmatprep.subr.mxu0 0.0
    %174 = vmatpush2.msra.mxu0 0.0
    %175 = vmatprep.subr.mxu0 0.0
    %176 = vmatpush2.msra.mxu0 0.0
    %177 = vmatprep.subr.mxu0 0.0
    %178 = vmatpush2.msra.mxu0 0.0
    %179 = vmatprep.subr.mxu0 0.0
    %180 = vmatpush2.msra.mxu0 0.0
    %181 = vmatprep.subr.mxu0 0.0
    %182 = vmatpush2.msra.mxu0 0.0
    %183 = vmatprep.subr.mxu0 0.0
    %184 = vmatpush2.msra.mxu0 0.0
    %185 = vmatprep.subr.mxu0 0.0
    %186 = vmatpush2.msra.mxu0 0.0
    %187 = vmatprep.subr.mxu0 0.0
    %188 = vmatpush2.msra.mxu0 0.0
    %189 = vmatprep.subr.mxu0 0.0
    %190 = vmatpush2.msra.mxu0 0.0
    %191 = vmatprep.subr.mxu0 0.0
    %192 = vmatpush2.msra.mxu0 0.0
    %193 = vmatprep.subr.mxu0 0.0
    %194 = vmatpush2.msra.mxu0 0.0
    %195 = vmatprep.subr.mxu0 0.0
    %196 = vmatpush2.msra.mxu0 0.0
    %197 = vmatprep.subr.mxu0 0.0
    %198 = vmatpush2.msra.mxu0 0.0
    %199 = vmatprep.mubr.f32.mxu0 0.0
    %200 = vmatmul.mubr.f32.gmra.mxu0 %v70
    %v201 = vpop.f32.mrf.mxu0
    %v202 = vadd.f32 0.0, %v201
    %v203 = vpop.f32.mrf.mxu0
    %v204 = vadd.f32 0.0, %v203
    %205 = vdwg.mxu0
    %206 = vmatprep.subr.mxu0 %v134
    %207 = vmatpush1.msra.mxu0 %v133
    %208 = vmatprep.subr.mxu0 %v130
    %209 = vmatpush1.msra.mxu0 %v129
    %210 = vmatprep.subr.mxu0 %v126
    %211 = vmatpush1.msra.mxu0 %v125
    %212 = vmatprep.subr.mxu0 %v122
    %213 = vmatpush1.msra.mxu0 %v121
    %214 = vmatprep.subr.mxu0 %v118
    %215 = vmatpush1.msra.mxu0 %v117
    %216 = vmatprep.subr.mxu0 %v114
    %217 = vmatpush1.msra.mxu0 %v113
    %218 = vmatprep.subr.mxu0 %v110
    %219 = vmatpush1.msra.mxu0 %v109
    %220 = vmatprep.subr.mxu0 %v106
    %221 = vmatpush1.msra.mxu0 %v105
    %222 = vmatprep.subr.mxu0 %v102
    %223 = vmatpush1.msra.mxu0 %v101
    %224 = vmatprep.subr.mxu0 %v98
    %225 = vmatpush1.msra.mxu0 %v97
    %226 = vmatprep.subr.mxu0 %v94
    %227 = vmatpush1.msra.mxu0 %v93
    %228 = vmatprep.subr.mxu0 %v90
    %229 = vmatpush1.msra.mxu0 %v89
    %230 = vmatprep.subr.mxu0 %v86
    %231 = vmatpush1.msra.mxu0 %v85
    %232 = vmatprep.subr.mxu0 %v82
    %233 = vmatpush1.msra.mxu0 %v81
    %234 = vmatprep.subr.mxu0 %v78
    %235 = vmatpush1.msra.mxu0 %v77
    %236 = vmatprep.subr.mxu0 %v74
    %237 = vmatpush1.msra.mxu0 %v73
    %238 = vmatprep.subr.mxu0 0.0
    %239 = vmatpush2.msra.mxu0 0.0
    %240 = vmatprep.subr.mxu0 0.0
    %241 = vmatpush2.msra.mxu0 0.0
    %242 = vmatprep.subr.mxu0 0.0
    %243 = vmatpush2.msra.mxu0 0.0
    %244 = vmatprep.subr.mxu0 0.0
    %245 = vmatpush2.msra.mxu0 0.0
    %246 = vmatprep.subr.mxu0 0.0
    %247 = vmatpush2.msra.mxu0 0.0
    %248 = vmatprep.subr.mxu0 0.0
    %249 = vmatpush2.msra.mxu0 0.0
    %250 = vmatprep.subr.mxu0 0.0
    %251 = vmatpush2.msra.mxu0 0.0
    %252 = vmatprep.subr.mxu0 0.0
    %253 = vmatpush2.msra.mxu0 0.0
    %254 = vmatprep.subr.mxu0 0.0
    %255 = vmatpush2.msra.mxu0 0.0
    %256 = vmatprep.subr.mxu0 0.0
    %257 = vmatpush2.msra.mxu0 0.0
    %258 = vmatprep.subr.mxu0 0.0
    %259 = vmatpush2.msra.mxu0 0.0
    %260 = vmatprep.subr.mxu0 0.0
    %261 = vmatpush2.msra.mxu0 0.0
    %262 = vmatprep.subr.mxu0 0.0
    %263 = vmatpush2.msra.mxu0 0.0
    %264 = vmatprep.subr.mxu0 0.0
    %265 = vmatpush2.msra.mxu0 0.0
    %266 = vmatprep.subr.mxu0 0.0
    %267 = vmatpush2.msra.mxu0 0.0
    %268 = vmatprep.subr.mxu0 0.0
    %269 = vmatpush2.msra.mxu0 0.0
    %270 = vmatprep.mubr.f32.mxu0 0.0
    %271 = vmatmul.mubr.f32.gmra.mxu0 %v70
    %v272 = vpop.f32.mrf.mxu0
    %v273 = vadd.f32 0.0, %v272
    %v274 = vpop.f32.mrf.mxu0
    %v275 = vadd.f32 0.0, %v274
    %276 = vdwg.mxu0
    %v277 = vadd.f32 %v66, %v202
    %v278 = vadd.f32 %v67, %v204
    %v279 = vadd.f32 %v68, %v273
    %v280 = vadd.f32 %v69, %v275
    %281 = vst [vmem:[#allocation2] sm:$0xff] %v277
    %282 = vst [vmem:[#allocation2 + $0x8] sm:$0xff] %v278
    %283 = vst [vmem:[#allocation2 + $0x10] sm:$0xff] %v279
    %284 = vst [vmem:[#allocation2 + $0x18] sm:$0xff] %v280
    // Predicated region
    $region34: #{tpu_custom_call.1} parent=1 // pred_check
      %p285 = pneg %p58
    $region35: #{tpu_custom_call.1} parent=1 // pred_check_branch
      %287 = sbr.rel (%p285) target = $region37
    $region36: #{tpu_custom_call.1} parent=1 // pred_region
      %v288 = vld [vmem:[#allocation2] sm:$0xff]
      %v289 = vld [vmem:[#allocation2 + $0x8] sm:$0xff]
      %v290 = vld [vmem:[#allocation2 + $0x10] sm:$0xff]
      %v291 = vld [vmem:[#allocation2 + $0x18] sm:$0xff]
      %v292 = vld [vmem:[%s3] sm:$0xf]
      %v294 = vlaneseq
      %v295 = vshrl.u32 %v294, 7
      %v296 = vsub.s32 0, %v295
      %v297 = vrot.slane %v292, %v296
      %v298 = vlaneseq
      %v299 = vshrl.u32 %v298, 7
      %v300 = vsub.s32 1, %v299
      %v301 = vrot.slane %v292, %v300
      %v302 = vlaneseq
      %v303 = vshrl.u32 %v302, 7
      %v304 = vsub.s32 2, %v303
      %v305 = vrot.slane %v292, %v304
      %v306 = vlaneseq
      %v307 = vshrl.u32 %v306, 7
      %v308 = vsub.s32 3, %v307
      %v309 = vrot.slane %v292, %v308
      %v314 = vadd.f32 %v288, %v297
      %v315 = vadd.f32 %v289, %v301
      %v316 = vadd.f32 %v290, %v305
      %v317 = vadd.f32 %v291, %v309
      %v318 = vmul.f32 %v315, 0.5
      %v319 = vtanh.pop %v318
      %v320 = vmul.f32 %v319, 0.5
      %v321 = vadd.f32 %v320, 0.5
      %v322 = vld [vmem:[#allocation6] sm:$0xff]
      %v323 = vmul.f32 %v321, %v322
      %v324 = vmul.f32 %v314, 0.5
      %v325 = vtanh.pop %v324
      %v326 = vmul.f32 %v325, 0.5
      %v327 = vadd.f32 %v326, 0.5
      %v328 = vtanh.pop %v316
      %v329 = vmul.f32 %v327, %v328
      %v330 = vadd.f32 %v323, %v329
      %v331 = vmul.f32 %v317, 0.5
      %v332 = vtanh.pop %v331
      %v333 = vmul.f32 %v332, 0.5
      %v334 = vadd.f32 %v333, 0.5
      %v335 = vtanh.pop %v330
      %v336 = vmul.f32 %v334, %v335
      %337 = vst [vmem:[#allocation9] sm:$0xff] %v336
      %338 = vst [vmem:[#allocation10] sm:$0xff] %v330
    $region37: #{tpu_custom_call.1} parent=1 // pred_fallthru
      _
    // Predicated region
    $region38: #{tpu_custom_call.1} parent=1 // pred_check
      _
    $region39: #{tpu_custom_call.1} parent=1 // pred_check_branch
      %340 = sbr.rel (0) target = $region41
    $region40: #{tpu_custom_call.1} parent=1 // pred_region
      %s342 = ssub.s32 128, 128
      %343 = vsyncadd [#allocation5], %s342
      %s345 = sshll.u32 [#allocation9], 4
      %s346 = int_to_ptr.vmem [resolvable:$true] %s345
      %348 = dma.vmem_to_hbm [thread:$0]  %s346, 128, %s4, [#allocation5]
    $region41: #{tpu_custom_call.1} parent=1 // pred_fallthru
      _
    // Predicated region
    $region42: #{tpu_custom_call.1} parent=1 // pred_check
      _
    $region43: #{tpu_custom_call.1} parent=1 // pred_check_branch
      %350 = sbr.rel (0) target = $region45
    $region44: #{tpu_custom_call.1} parent=1 // pred_region
      %s352 = ssub.s32 128, 128
      %353 = vsyncadd [#allocation11], %s352
      %s355 = sshll.u32 [#allocation10], 4
      %s356 = int_to_ptr.vmem [resolvable:$true] %s355
      %358 = dma.vmem_to_hbm [thread:$0]  %s356, 128, %s5, [#allocation11]
    $region45: #{tpu_custom_call.1} parent=1 // pred_fallthru
      _
    // Predicated region
    $region46: #{tpu_custom_call.1} parent=1 // pred_check
      _
    $region47: #{tpu_custom_call.1} parent=1 // pred_check_branch
      %360 = sbr.rel (0) target = $region49
    $region48: #{tpu_custom_call.1} parent=1 // pred_region
      %361 = dma.done [#allocation5], 128
    $region49: #{tpu_custom_call.1} parent=1 // pred_fallthru
      _
    // Predicated region
    $region50: #{tpu_custom_call.1} parent=1 // pred_check
      _
    $region51: #{tpu_custom_call.1} parent=1 // pred_check_branch
      %363 = sbr.rel (0) target = $region53
    $region52: #{tpu_custom_call.1} parent=1 // pred_region
      %364 = dma.done [#allocation11], 128
    $region53: #{tpu_custom_call.1} parent=1 // pred_fallthru
      _
    %365 = vsyncpa [#allocation4], 1
    %366 = vsyncpa [#allocation7], 1
    %367 = vsyncpa [#allocation5], 1
    %368 = vsyncpa [#allocation11], 1

</llo_original>
